<compile_context>
chip_gen: v6e
topology: v6e:2x2x1
jax: 0.10.0
libtpu: 0.0.40
codegen_flags: <defaults>
</compile_context>

<pallas_src>
import random

import jax
import jax.numpy as jnp
import numpy as np
from jax.experimental import pallas as pl
from jax.experimental.pallas import tpu as pltpu


# --------------------------------------------------------------------------- #
# Pallas kernel: tiled  acc += mask_tile @ embed_tile ; out = acc * inv_count  #
# --------------------------------------------------------------------------- #
def _mean_agg_kernel(mask_ref, embed_ref, inv_ref, out_ref, acc_ref):
    k = pl.program_id(2)

    @pl.when(k == 0)
    def _():
        acc_ref[...] = jnp.zeros_like(acc_ref)

    acc_ref[...] += jnp.dot(
        mask_ref[...], embed_ref[...], preferred_element_type=jnp.float32
    )

    @pl.when(k == pl.num_programs(2) - 1)
    def _():
        # inv_ref is [Bt, 1] f32 -> broadcasts over the D tile at finalize only.
        out_ref[...] = (acc_ref[...] * inv_ref[...]).astype(out_ref.dtype)


def _round_up(x, m):
    return ((x + m - 1) // m) * m


def _choose_tile(dim, align, cap):
    """Pick a tile size (multiple of `align`, <= cap) and a padded dim it divides."""
    tile = min(_round_up(max(dim, 1), align), cap)
    padded = _round_up(max(dim, 1), tile)
    return tile, padded


def mean_aggregate_pallas(mask, embed_matrix, counts=None):
    """mask: [B, U] (0/1), embed_matrix: [U, D] -> [B, D] f32 mean-aggregated features."""
    B, U = mask.shape
    U2, D = embed_matrix.shape
    assert U == U2

    if counts is None:
        counts = jnp.sum(mask.astype(jnp.float32), axis=1)
    counts = jnp.asarray(counts, jnp.float32).reshape(B, 1)
    inv_count = jnp.where(counts > 0, 1.0 / counts, jnp.zeros_like(counts))

    # Tile sizes: bf16 operand tiles double-buffered stay < ~8 MiB total, which fits the
    # v7x 64 MiB VMEM with large headroom (and v5e/v6e trivially). Last two block dims
    # are (8,128)-aligned.
    Bt, Bp = _choose_tile(B, 8, 256)
    Ut, Up = _choose_tile(U, 128, 2048)
    Dt, Dp = _choose_tile(D, 128, 512)

    # bf16 operands (0/1 mask is exact in bf16), f32 accumulation inside the kernel.
    mask_p = jnp.pad(mask.astype(jnp.bfloat16), ((0, Bp - B), (0, Up - U)))
    embed_p = jnp.pad(embed_matrix.astype(jnp.bfloat16), ((0, Up - U), (0, Dp - D)))
    inv_p = jnp.pad(inv_count, ((0, Bp - B), (0, 0)))

    grid = (Bp // Bt, Dp // Dt, Up // Ut)  # reduction (U) axis last

    out_p = pl.pallas_call(
        _mean_agg_kernel,
        out_shape=jax.ShapeDtypeStruct((Bp, Dp), jnp.float32),
        grid_spec=pltpu.PrefetchScalarGridSpec(
            num_scalar_prefetch=0,
            grid=grid,
            in_specs=[
                pl.BlockSpec((Bt, Ut), lambda i, j, k: (i, k)),   # mask tile
                pl.BlockSpec((Ut, Dt), lambda i, j, k: (k, j)),   # embed tile
                pl.BlockSpec((Bt, 1), lambda i, j, k: (i, 0)),    # inv_count tile
            ],
            out_specs=pl.BlockSpec((Bt, Dt), lambda i, j, k: (i, j)),
            scratch_shapes=[pltpu.VMEM((Bt, Dt), jnp.float32)],
        ),
        compiler_params=pltpu.CompilerParams(
            dimension_semantics=("parallel", "parallel", "arbitrary"),
            vmem_limit_bytes=32 * 1024 * 1024,
        ),
        cost_estimate=pl.CostEstimate(
            flops=2 * Bp * Up * Dp,
            transcendentals=0,
            bytes_accessed=2 * (Bp * Up + Up * Dp) + 4 * Bp * Dp,
        ),
    )(mask_p, embed_p, inv_p)

    return out_p[:B, :D]


# --------------------------------------------------------------------------- #
# JAX/Pallas port of the GraphSAGE MeanAggregator forward pass                 #
# --------------------------------------------------------------------------- #
class MeanAggregatorJAX:
    def __init__(self, features, gcn=False):
        # features: function mapping an int32 array of node ids -> [n, D] feature matrix
        self.features = features
        self.gcn = gcn

    def forward(self, nodes, to_neighs, num_sample=10):
        _set = set
        if num_sample is not None:
            _sample = random.sample
            samp_neighs = [
                _set(_sample(sorted(to_neigh), num_sample))
                if len(to_neigh) >= num_sample
                else to_neigh
                for to_neigh in to_neighs
            ]
        else:
            samp_neighs = to_neighs
        if self.gcn:
            samp_neighs = [
                samp_neigh | set([nodes[i]]) for i, samp_neigh in enumerate(samp_neighs)
            ]
        unique_nodes_list = list(set.union(*samp_neighs))
        unique_nodes = {n: i for i, n in enumerate(unique_nodes_list)}

        # Host-side 0/1 incidence mask + neighbor counts (normalization applied via
        # inv_count inside the kernel, fused with the final writeback).
        mask_np = np.zeros((len(samp_neighs), len(unique_nodes)), dtype=np.float32)
        column_indices = [unique_nodes[n] for samp_neigh in samp_neighs for n in samp_neigh]
        row_indices = [i for i in range(len(samp_neighs)) for _ in samp_neighs[i]]
        mask_np[row_indices, column_indices] = 1.0
        counts_np = np.asarray([len(s) for s in samp_neighs], dtype=np.float32)

        mask = jnp.asarray(mask_np)
        embed_matrix = self.features(jnp.asarray(unique_nodes_list, dtype=jnp.int32))

        return mean_aggregate_pallas(
            mask, embed_matrix.astype(jnp.float32), counts=counts_np
        )


if __name__ == "__main__":
    random.seed(0)

    NUM_NODES = 64   # graph size
    FEAT_DIM = 32    # feature dim
    BATCH = 8        # nodes in batch
    NUM_SAMPLE = 10

    # Deterministic embedding table; features(ids) gathers rows.
    key = jax.random.PRNGKey(0)
    feat_table = jax.random.normal(key, (NUM_NODES, FEAT_DIM), dtype=jnp.float32)
    features = lambda ids: jnp.take(feat_table, ids, axis=0)

    # Deterministic synthetic graph: each node's neighbor set.
    rng = np.random.RandomState(0)
    nodes = list(range(BATCH))
    to_neighs = []
    for i in nodes:
        deg = int(rng.randint(3, 15))
        neighs = set(int(x) for x in rng.choice(NUM_NODES, size=deg, replace=False))
        neighs.discard(i)
        if not neighs:
            neighs = {int((i + 1) % NUM_NODES)}
        to_neighs.append(neighs)

    agg = MeanAggregatorJAX(features, gcn=False)
    out = agg.forward(nodes, to_neighs, num_sample=NUM_SAMPLE)
    out = jax.block_until_ready(out)

    assert out.shape == (BATCH, FEAT_DIM), out.shape
    assert bool(jnp.all(jnp.isfinite(out)))

    # Reference check (pure JAX/NumPy, f32) against the mean-aggregation semantics.
    # Rebuild mask/embed deterministically the same way forward() did.
    random.seed(0)
    samp_neighs = [
        set(random.sample(sorted(t), NUM_SAMPLE)) if len(t) >= NUM_SAMPLE else t
        for t in to_neighs
    ]
    unique_nodes_list = list(set.union(*samp_neighs))
    unique_nodes = {n: i for i, n in enumerate(unique_nodes_list)}
    mask_ref = np.zeros((len(samp_neighs), len(unique_nodes)), dtype=np.float32)
    cols = [unique_nodes[n] for s in samp_neighs for n in s]
    rows = [i for i in range(len(samp_neighs)) for _ in samp_neighs[i]]
    mask_ref[rows, cols] = 1.0
    embed_ref = np.asarray(features(jnp.asarray(unique_nodes_list, dtype=jnp.int32)))
    ref = (mask_ref / mask_ref.sum(1, keepdims=True)) @ embed_ref

    np.testing.assert_allclose(np.asarray(out), ref, rtol=2e-2, atol=2e-2)

    print("KERNEL_OK")
</pallas_src>

<mosaic_0001>
module attributes {stable_mosaic.version = 11 : i64} {
  func.func @_mean_agg_kernel(%arg0: i32, %arg1: i32, %arg2: i32, %arg3: memref<8x128xbf16, #tpu.memory_space<vmem>>, %arg4: memref<128x128xbf16, #tpu.memory_space<vmem>>, %arg5: memref<8x1xf32, #tpu.memory_space<vmem>>, %arg6: memref<8x128xf32, #tpu.memory_space<vmem>>, %arg7: memref<8x128xf32, #tpu.memory_space<vmem>>) attributes {dimension_semantics = [#tpu.dimension_semantics<parallel>, #tpu.dimension_semantics<parallel>, #tpu.dimension_semantics<arbitrary>], iteration_bounds = array<i64: 1, 1, 1>, scalar_prefetch = 0 : i64, scratch_operands = 1 : i64, tpu.core_type = #tpu.core_type<tc>, window_params = [{transform_indices = @transform_0, window_bounds = array<i64: 8, 128>}, {transform_indices = @transform_1, window_bounds = array<i64: 128, 128>}, {transform_indices = @transform_2, window_bounds = array<i64: 8, 1>}, {transform_indices = @transform_3, window_bounds = array<i64: 8, 128>}]} {
    %c0_i32 = arith.constant 0 : i32
    %0 = arith.cmpi eq, %arg2, %c0_i32 : i32
    %1 = arith.extui %0 : i1 to i32
    %c0_i32_0 = arith.constant 0 : i32
    %2 = arith.cmpi ne, %1, %c0_i32_0 : i32
    scf.if %2 {
      %cst_10 = arith.constant 0.000000e+00 : f32
      %12 = vector.broadcast %cst_10 : f32 to vector<8x128xf32>
      %c0_11 = arith.constant 0 : index
      %c0_12 = arith.constant 0 : index
      %13 = vector.load %arg7[%c0_11, %c0_12] : memref<8x128xf32, #tpu.memory_space<vmem>>, vector<8x128xf32>
      tpu.vector_store %arg7[%c0_11, %c0_12], %12 {strides = array<i32>} : memref<8x128xf32, #tpu.memory_space<vmem>>, vector<8x128xf32>,
    } else {
    }
    %c0 = arith.constant 0 : index
    %c0_1 = arith.constant 0 : index
    %3 = vector.load %arg7[%c0, %c0_1] : memref<8x128xf32, #tpu.memory_space<vmem>>, vector<8x128xf32>
    %c0_2 = arith.constant 0 : index
    %c0_3 = arith.constant 0 : index
    %4 = vector.load %arg3[%c0_2, %c0_3] : memref<8x128xbf16, #tpu.memory_space<vmem>>, vector<8x128xbf16>
    %c0_4 = arith.constant 0 : index
    %c0_5 = arith.constant 0 : index
    %5 = vector.load %arg4[%c0_4, %c0_5] : memref<128x128xbf16, #tpu.memory_space<vmem>>, vector<128x128xbf16>
    %cst = arith.constant dense<0.000000e+00> : vector<8x128xf32>
    %6 = tpu.matmul %4, %5, %cst {dimension_numbers = #tpu.dot_dimension_numbers<[1], [0], [0], [1], [0, 0, 1, 1], [], []>} : vector<8x128xbf16>, vector<128x128xbf16>, vector<8x128xf32> -> vector<8x128xf32>
    %7 = arith.addf %3, %6 : vector<8x128xf32>
    %c0_6 = arith.constant 0 : index
    %c0_7 = arith.constant 0 : index
    %8 = vector.load %arg7[%c0_6, %c0_7] : memref<8x128xf32, #tpu.memory_space<vmem>>, vector<8x128xf32>
    tpu.vector_store %arg7[%c0_6, %c0_7], %7 {strides = array<i32>} : memref<8x128xf32, #tpu.memory_space<vmem>>, vector<8x128xf32>,
    %c0_i32_8 = arith.constant 0 : i32
    %9 = arith.cmpi eq, %arg2, %c0_i32_8 : i32
    %10 = arith.extui %9 : i1 to i32
    %c0_i32_9 = arith.constant 0 : i32
    %11 = arith.cmpi ne, %10, %c0_i32_9 : i32
    scf.if %11 {
      %c0_10 = arith.constant 0 : index
      %c0_11 = arith.constant 0 : index
      %12 = vector.load %arg7[%c0_10, %c0_11] : memref<8x128xf32, #tpu.memory_space<vmem>>, vector<8x128xf32>
      %c0_12 = arith.constant 0 : index
      %c0_13 = arith.constant 0 : index
      %13 = vector.load %arg5[%c0_12, %c0_13] : memref<8x1xf32, #tpu.memory_space<vmem>>, vector<8x1xf32>
      %14 = vector.broadcast %13 : vector<8x1xf32> to vector<8x128xf32>
      %15 = arith.mulf %12, %14 : vector<8x128xf32>
      %c0_14 = arith.constant 0 : index
      %c0_15 = arith.constant 0 : index
      %16 = vector.load %arg6[%c0_14, %c0_15] : memref<8x128xf32, #tpu.memory_space<vmem>>, vector<8x128xf32>
      tpu.vector_store %arg6[%c0_14, %c0_15], %15 {strides = array<i32>} : memref<8x128xf32, #tpu.memory_space<vmem>>, vector<8x128xf32>,
    } else {
    }
    return
  }
  func.func @transform_0(%arg0: i32, %arg1: i32, %arg2: i32) -> (i32, i32) {
    %c0_i32 = arith.constant 0 : i32
    return %arg0, %arg2 : i32, i32
  }
  func.func @transform_1(%arg0: i32, %arg1: i32, %arg2: i32) -> (i32, i32) {
    %c0_i32 = arith.constant 0 : i32
    return %arg2, %arg1 : i32, i32
  }
  func.func @transform_2(%arg0: i32, %arg1: i32, %arg2: i32) -> (i32, i32) {
    %c0_i32 = arith.constant 0 : i32
    %c0_i32_0 = arith.constant 0 : i32
    return %arg0, %c0_i32 : i32, i32
  }
  func.func @transform_3(%arg0: i32, %arg1: i32, %arg2: i32) -> (i32, i32) {
    %c0_i32 = arith.constant 0 : i32
    return %arg0, %arg1 : i32, i32
  }
}

</mosaic_0001>

<llo_original>
// kernel: tpu_custom_call.1
$region0: #{tpu_custom_call.1}
  #allocation0 [shape = 'u32[]', space=smem, size = 0x4, offset = 0x4, fixed_abs, tag = 'smem constant byte address 0x4 - core index']
  #allocation1 [shape = 'u32[144,128]{1,0:T(1,128)}', space=vmem, size = 0x12000, scoped, tag = 'internal scratch']
  #allocation2 [shape = 'f32[8,128]{1,0:T(8,128)}', space=vmem, size = 0x1000, scoped, tag = 'scratch operand']
  %s0 = inlined_call_operand.vmem [shape: bf16[8,128], index: 0, kind: input, shape index: {}]
  %s1 = inlined_call_operand.hbm [shape: bf16[128,128], index: 1, kind: input, shape index: {}]
  %s2 = inlined_call_operand.vmem [shape: f32[8,1], index: 2, kind: input, shape index: {}]
  %s3 = inlined_call_operand.hbm [shape: f32[8,128], index: 3, kind: output, shape index: {}]
  %s4 = sld [smem:[#allocation0]]
  $region34: #{tpu_custom_call.1} parent=0
    _
  %s6 = ssub.s32 1, %s4
  %s7 = scalar_select 0, %s6, %s4
  $region1: #{tpu_custom_call.1} parent=0
    #allocation3 [shape = 'u8[32768]{0}', space=vmem, size = 0x8000, scoped, tag = 'input window, operand 1, single buffered']
    #allocation4 [shape = 's32[1]{0}', space=sflag, size = 0x4, scoped, tag = 'scoped memory for tpu_custom_call.1']
    #allocation5 [shape = 's32[1]{0}', space=sflag, size = 0x4, scoped, tag = 'scoped memory for tpu_custom_call.1']
    #allocation6 [shape = 'u8[4096]{0}', space=vmem, size = 0x1000, scoped, tag = 'output window, operand 0, single buffered']
    %8 = vsyncpa [#allocation4], 0
    %9 = vsyncpa [#allocation5], 0
    // Predicated region
    $region2: #{tpu_custom_call.1} parent=1 // pred_check
      _
    $region3: #{tpu_custom_call.1} parent=1 // pred_check_branch
      %11 = sbr.rel (0) target = $region5
    $region4: #{tpu_custom_call.1} parent=1 // pred_region
      _
    $region5: #{tpu_custom_call.1} parent=1 // pred_fallthru
      _
    // Predicated region
    $region6: #{tpu_custom_call.1} parent=1 // pred_check
      _
    $region7: #{tpu_custom_call.1} parent=1 // pred_check_branch
      %13 = sbr.rel (0) target = $region9
    $region8: #{tpu_custom_call.1} parent=1 // pred_region
      %s15 = ssub.s32 1024, 1024
      %16 = vsyncadd [#allocation4], %s15
      %s17 = sshll.u32 [#allocation3], 4
      %s18 = int_to_ptr.vmem [resolvable:$true] %s17
      %23 = dma.hbm_to_vmem [thread:$0]  %s1, 1024, %s18, [#allocation4], 64, 64, 4
    $region9: #{tpu_custom_call.1} parent=1 // pred_fallthru
      _
    // Predicated region
    $region10: #{tpu_custom_call.1} parent=1 // pred_check
      _
    $region11: #{tpu_custom_call.1} parent=1 // pred_check_branch
      %25 = sbr.rel (0) target = $region13
    $region12: #{tpu_custom_call.1} parent=1 // pred_region
      _
    $region13: #{tpu_custom_call.1} parent=1 // pred_fallthru
      _
    // Predicated region
    $region14: #{tpu_custom_call.1} parent=1 // pred_check
      _
    $region15: #{tpu_custom_call.1} parent=1 // pred_check_branch
      %27 = sbr.rel (0) target = $region17
    $region16: #{tpu_custom_call.1} parent=1 // pred_region
      %28 = dma.done [#allocation4], 1024
    $region17: #{tpu_custom_call.1} parent=1 // pred_fallthru
      _
    %p30 = scmp.eq.s32.totalorder 0, 0
    // Predicated region
    $region18: #{tpu_custom_call.1} parent=1 // pred_check
      %p31 = pneg %p30
    $region19: #{tpu_custom_call.1} parent=1 // pred_check_branch
      %33 = sbr.rel (%p31) target = $region21
    $region20: #{tpu_custom_call.1} parent=1 // pred_region
      %34 = vst [vmem:[#allocation2] sm:$0xff] 0.0
    $region21: #{tpu_custom_call.1} parent=1 // pred_fallthru
      _
    %v35 = vld [vmem:[#allocation2] sm:$0xff]
    %v36 = vld [vmem:[%s0] sm:$0xf]
    %v37 = vld [vmem:[#allocation3] sm:$0xf]
    %v38 = vld [vmem:[#allocation3 + $0x4] sm:$0xf]
    %v39 = vld [vmem:[#allocation3 + $0x8] sm:$0xf]
    %v40 = vld [vmem:[#allocation3 + $0xc] sm:$0xf]
    %v41 = vld [vmem:[#allocation3 + $0x10] sm:$0xf]
    %v42 = vld [vmem:[#allocation3 + $0x14] sm:$0xf]
    %v43 = vld [vmem:[#allocation3 + $0x18] sm:$0xf]
    %v44 = vld [vmem:[#allocation3 + $0x1c] sm:$0xf]
    %v45 = vld [vmem:[#allocation3 + $0x20] sm:$0xf]
    %v46 = vld [vmem:[#allocation3 + $0x24] sm:$0xf]
    %v47 = vld [vmem:[#allocation3 + $0x28] sm:$0xf]
    %v48 = vld [vmem:[#allocation3 + $0x2c] sm:$0xf]
    %v49 = vld [vmem:[#allocation3 + $0x30] sm:$0xf]
    %v50 = vld [vmem:[#allocation3 + $0x34] sm:$0xf]
    %v51 = vld [vmem:[#allocation3 + $0x38] sm:$0xf]
    %v52 = vld [vmem:[#allocation3 + $0x3c] sm:$0xf]
    %v69 = vunpack.c.l.b16 %v37
    %v70 = vunpack.c.l.b16 %v38
    %v71 = vunpack.c.l.b16 %v39
    %v72 = vunpack.c.l.b16 %v40
    %v73 = vunpack.c.l.b16 %v41
    %v74 = vunpack.c.l.b16 %v42
    %v75 = vunpack.c.l.b16 %v43
    %v76 = vunpack.c.l.b16 %v44
    %v77 = vunpack.c.l.b16 %v45
    %v78 = vunpack.c.l.b16 %v46
    %v79 = vunpack.c.l.b16 %v47
    %v80 = vunpack.c.l.b16 %v48
    %v81 = vunpack.c.l.b16 %v49
    %v82 = vunpack.c.l.b16 %v50
    %v83 = vunpack.c.l.b16 %v51
    %v84 = vunpack.c.l.b16 %v52
    %v85 = vpack.c.b16 %v70, %v69
    %v86 = vpack.c.b16 %v72, %v71
    %v87 = vpack.c.b16 %v74, %v73
    %v88 = vpack.c.b16 %v76, %v75
    %v89 = vpack.c.b16 %v78, %v77
    %v90 = vpack.c.b16 %v80, %v79
    %v91 = vpack.c.b16 %v82, %v81
    %v92 = vpack.c.b16 %v84, %v83
    %101 = vmatprep.subr.bf16.mxu0 0
    %102 = vmatpush1.bf16.msra.mxu0 %v92
    %103 = vmatprep.subr.bf16.mxu0 0
    %104 = vmatpush1.bf16.msra.mxu0 %v91
    %105 = vmatprep.subr.bf16.mxu0 0
    %106 = vmatpush1.bf16.msra.mxu0 %v90
    %107 = vmatprep.subr.bf16.mxu0 0
    %108 = vmatpush1.bf16.msra.mxu0 %v89
    %109 = vmatprep.subr.bf16.mxu0 0
    %110 = vmatpush1.bf16.msra.mxu0 %v88
    %111 = vmatprep.subr.bf16.mxu0 0
    %112 = vmatpush1.bf16.msra.mxu0 %v87
    %113 = vmatprep.subr.bf16.mxu0 0
    %114 = vmatpush1.bf16.msra.mxu0 %v86
    %115 = vmatprep.subr.bf16.mxu0 0
    %116 = vmatpush1.bf16.msra.mxu0 %v85
    %117 = vmatprep.subr.bf16.mxu0 0
    %118 = vmatpush2.bf16.msra.mxu0 0
    %119 = vmatprep.subr.bf16.mxu0 0
    %120 = vmatpush2.bf16.msra.mxu0 0
    %121 = vmatprep.subr.bf16.mxu0 0
    %122 = vmatpush2.bf16.msra.mxu0 0
    %123 = vmatprep.subr.bf16.mxu0 0
    %124 = vmatpush2.bf16.msra.mxu0 0
    %125 = vmatprep.subr.bf16.mxu0 0
    %126 = vmatpush2.bf16.msra.mxu0 0
    %127 = vmatprep.subr.bf16.mxu0 0
    %128 = vmatpush2.bf16.msra.mxu0 0
    %129 = vmatprep.subr.bf16.mxu0 0
    %130 = vmatpush2.bf16.msra.mxu0 0
    %131 = vmatprep.subr.bf16.mxu0 0
    %132 = vmatpush2.bf16.msra.mxu0 0
    %133 = vmatprep.mubr.bf16.mxu0 0
    %134 = vmatmul.mubr.bf16.gmra.mxu0 %v36
    %v135 = vpop.f32.mrf.mxu0
    %v136 = vadd.f32 0.0, %v135
    %v137 = vpop.f32.mrf.mxu0
    %v138 = vpop.f32.mrf.mxu0
    %v139 = vpop.f32.mrf.mxu0
    %140 = vdwg.mxu0
    %v141 = vadd.f32 %v35, %v136
    %142 = vst [vmem:[#allocation2] sm:$0xff] %v141
    // Predicated region
    $region22: #{tpu_custom_call.1} parent=1 // pred_check
      %p143 = pneg %p30
    $region23: #{tpu_custom_call.1} parent=1 // pred_check_branch
      %145 = sbr.rel (%p143) target = $region25
    $region24: #{tpu_custom_call.1} parent=1 // pred_region
      %v146 = vld [vmem:[#allocation2] sm:$0xff]
      %v147 = vld [vmem:[%s2] sm:$0xff]
      %149 = vset.pattern.permute.xlu0 0
      %150 = vperm.xlu0 %149, %v147
      %v151 = vpop.permute.xlu0 %150
      %v153 = vmul.f32 %v146, %v151
      %154 = vst [vmem:[#allocation6] sm:$0xff] %v153
    $region25: #{tpu_custom_call.1} parent=1 // pred_fallthru
      _
    // Predicated region
    $region26: #{tpu_custom_call.1} parent=1 // pred_check
      _
    $region27: #{tpu_custom_call.1} parent=1 // pred_check_branch
      %156 = sbr.rel (0) target = $region29
    $region28: #{tpu_custom_call.1} parent=1 // pred_region
      %s158 = ssub.s32 128, 128
      %159 = vsyncadd [#allocation5], %s158
      %s161 = sshll.u32 [#allocation6], 4
      %s162 = int_to_ptr.vmem [resolvable:$true] %s161
      %164 = dma.vmem_to_hbm [thread:$0]  %s162, 128, %s3, [#allocation5]
    $region29: #{tpu_custom_call.1} parent=1 // pred_fallthru
      _
    // Predicated region
    $region30: #{tpu_custom_call.1} parent=1 // pred_check
      _
    $region31: #{tpu_custom_call.1} parent=1 // pred_check_branch
      %166 = sbr.rel (0) target = $region33
    $region32: #{tpu_custom_call.1} parent=1 // pred_region
      %167 = dma.done [#allocation5], 128
    $region33: #{tpu_custom_call.1} parent=1 // pred_fallthru
      _
    %168 = vsyncpa [#allocation4], 1
    %169 = vsyncpa [#allocation5], 1

</llo_original>
